<compile_context>
chip_gen: v5e
topology: v5e:2x2
jax: 0.10.0
libtpu: 0.0.40
codegen_flags: <defaults>
</compile_context>

<pallas_src>
import jax
import jax.numpy as jnp
from jax.experimental import pallas as pl
from jax.experimental.pallas import tpu as pltpu


# ---------------------------------------------------------------------------
# One-time precompute kernel: composition-node GCN output, row-normalized.
#   emb_comp = A_hat[:n_comp] @ (X @ W) + b ;  emb_comp /= ||emb_comp||_2
# ---------------------------------------------------------------------------
def gcn_comp_norm_kernel(a_ref, x_ref, w_ref, b_ref, o_ref):
    xw = jnp.dot(x_ref[...], w_ref[...], preferred_element_type=jnp.float32)       # (V, Do)
    e = jnp.dot(a_ref[...], xw, preferred_element_type=jnp.float32) + b_ref[...]   # (P, Do)
    inv = jax.lax.rsqrt(jnp.sum(e * e, axis=1, keepdims=True) + 1e-12)
    o_ref[...] = e * inv


def gcn_comp_norm(a_comp, x, w, b):
    P, V = a_comp.shape
    Din = x.shape[1]
    Do = w.shape[1]
    flops = 2 * V * Din * Do + 2 * P * V * Do
    bytes_accessed = 4 * (P * V + V * Din + Din * Do + Do + P * Do)
    full = lambda shape: pl.BlockSpec(shape, lambda i: (0, 0))
    return pl.pallas_call(
        gcn_comp_norm_kernel,
        out_shape=jax.ShapeDtypeStruct((P, Do), jnp.float32),
        grid=(1,),
        in_specs=[full((P, V)), full((V, Din)), full((Din, Do)), full((1, Do))],
        out_specs=full((P, Do)),
        compiler_params=pltpu.CompilerParams(
            dimension_semantics=("arbitrary",),
            vmem_limit_bytes=64 << 20),
        cost_estimate=pl.CostEstimate(flops=flops, transcendentals=P,
                                      bytes_accessed=bytes_accessed),
    )(a_comp, x, w, b)


# ---------------------------------------------------------------------------
# Fused per-inference kernel (whole padded batch, one grid point):
#   lane-dense spatial mean -> fused conv+proj matmul -> ReLU -> folded BN
#   -> L2 row-normalize -> cosine logits against padded prototypes.
# ---------------------------------------------------------------------------
def fused_forward_kernel(x_ref, wfused_ref, vecs_ref, embt_ref, o_ref):
    # x_ref: (N_pad, Cin, HW) f32 — HW (=256) on the lane axis -> lane-dense reduce
    pooled = jnp.mean(x_ref[...], axis=-1)                                         # (N_pad, Cin) f32
    # fused backbone-1x1-conv + proj (pool-first exact by linearity;
    # no nonlinearity between conv and proj so the weight fold is exact)
    y = jnp.dot(pooled.astype(jnp.bfloat16), wfused_ref[...],
                preferred_element_type=jnp.float32)                                # (N_pad, Do) f32
    y = y + vecs_ref[0:1, :]                                                       # + b_fused
    y = jnp.maximum(y, 0.0)                                                        # ReLU
    y = y * vecs_ref[1:2, :] + vecs_ref[2:3, :]                                    # BN(eval), folded
    # cosine metric: normalize rows; prototypes already normalized + transposed
    inv = jax.lax.rsqrt(jnp.sum(y * y, axis=1, keepdims=True) + 1e-12)
    yn = (y * inv).astype(jnp.bfloat16)
    o_ref[...] = jnp.dot(yn, embt_ref[...], preferred_element_type=jnp.float32)    # (N_pad, P_pad)


def fused_forward(x_flat, w_fused, vecs, emb_t):
    N_pad, Cin, HW = x_flat.shape
    Do = w_fused.shape[1]
    P_pad = emb_t.shape[1]
    flops = (N_pad * Cin * HW            # pooling adds
             + 2 * N_pad * Cin * Do      # fused conv+proj matmul
             + 2 * N_pad * Do * P_pad)   # cosine contraction
    bytes_accessed = (N_pad * Cin * HW * 4 + Cin * Do * 2 + 3 * Do * 4
                      + Do * P_pad * 2 + N_pad * P_pad * 4)
    return pl.pallas_call(
        fused_forward_kernel,
        out_shape=jax.ShapeDtypeStruct((N_pad, P_pad), jnp.float32),
        grid=(1,),
        in_specs=[
            pl.BlockSpec((N_pad, Cin, HW), lambda i: (0, 0, 0)),
            pl.BlockSpec((Cin, Do), lambda i: (0, 0)),
            pl.BlockSpec((3, Do), lambda i: (0, 0)),
            pl.BlockSpec((Do, P_pad), lambda i: (0, 0)),
        ],
        out_specs=pl.BlockSpec((N_pad, P_pad), lambda i: (0, 0)),
        compiler_params=pltpu.CompilerParams(
            dimension_semantics=("arbitrary",),
            vmem_limit_bytes=64 << 20),
        cost_estimate=pl.CostEstimate(flops=flops, transcendentals=N_pad,
                                      bytes_accessed=bytes_accessed),
    )(x_flat, w_fused, vecs, emb_t)


# ---------------------------------------------------------------------------
# Glue / one-time precompute
# ---------------------------------------------------------------------------
def gcn_norm_adj(edge_index, num_nodes):
    # PyG GCNConv normalization: add self-loops, D^{-1/2}(A+I)D^{-1/2}
    A = jnp.zeros((num_nodes, num_nodes), jnp.float32)
    A = A.at[edge_index[1], edge_index[0]].set(1.0)  # A[dst, src]
    A = A + jnp.eye(num_nodes, dtype=jnp.float32)
    deg = jnp.sum(A, axis=1)
    dinv = 1.0 / jnp.sqrt(deg)
    return A * dinv[:, None] * dinv[None, :]


def round_up(v, m):
    return ((v + m - 1) // m) * m


def precompute_comp_embeddings(params, a_hat, n_comp):
    """Input-independent: prototype concat -> GCN -> normalize -> transpose -> pad."""
    dim_proto = params["attr_protos"].shape[-1]
    embeddings = jnp.concatenate(
        [jnp.zeros((n_comp, dim_proto), jnp.float32),
         params["attr_protos"], params["obj_protos"]], axis=0)          # (V, dim_proto)
    a_comp = a_hat[:n_comp]                                             # only comp rows needed
    emb_n = gcn_comp_norm(a_comp, embeddings,
                          params["gcn1_w"], params["gcn1_b"])           # (n_comp, dim_out)
    emb_t = jnp.transpose(emb_n)                                        # (dim_out, n_comp)
    p_pad = max(128, round_up(n_comp, 128))
    emb_t = jnp.pad(emb_t, ((0, 0), (0, p_pad - n_comp)))               # lane-dense columns
    return emb_t.astype(jnp.bfloat16)                                   # (dim_out, P_pad) bf16


def precompute_fused_constants(params, eps=1e-5):
    """Fold conv+proj weights and BN(eval) constants; stack small vectors."""
    w_fused = params["w_bb"] @ params["w_proj"]                         # (Cin, Do)
    b_fused = params["b_bb"] @ params["w_proj"] + params["b_proj"]      # (1, Do)
    scale = params["bn_gamma"] * jax.lax.rsqrt(params["bn_var"] + eps)  # (1, Do)
    shift = params["bn_beta"] - params["bn_mean"] * scale               # (1, Do)
    vecs = jnp.concatenate([b_fused, scale, shift], axis=0)             # (3, Do) f32
    return w_fused.astype(jnp.bfloat16), vecs


def graph_model_forward(x_nchw, w_fused, vecs, emb_t, n_comp):
    N, C, H, W = x_nchw.shape
    HW = H * W
    # NCHW -> (N, C, H*W): pure reshape (channel-then-spatial already), HW on lanes
    x_flat = x_nchw.reshape(N, C, HW)
    n_pad = max(8, round_up(N, 8))
    if n_pad != N:
        x_flat = jnp.pad(x_flat, ((0, n_pad - N), (0, 0), (0, 0)))
    logits_pad = fused_forward(x_flat, w_fused, vecs, emb_t)            # (N_pad, P_pad)
    return logits_pad[:N, :n_comp]                                      # (N, n_comp)


if __name__ == "__main__":
    key = jax.random.PRNGKey(0)

    # small shapes consistent with the module's forward
    N, Cin, H, W = 2, 4, 16, 16
    back_out, dim_out, dim_proto = 48, 32, 16
    n_attr, n_obj = 6, 5
    n_comp = 10
    V = n_comp + n_attr + n_obj

    ks = jax.random.split(key, 9)
    params = dict(
        w_bb=jax.random.normal(ks[0], (Cin, back_out), jnp.float32) * 0.1,
        b_bb=jax.random.normal(ks[1], (1, back_out), jnp.float32) * 0.01,
        w_proj=jax.random.normal(ks[2], (back_out, dim_out), jnp.float32) * 0.1,
        b_proj=jax.random.normal(ks[3], (1, dim_out), jnp.float32) * 0.01,
        bn_gamma=jnp.ones((1, dim_out), jnp.float32),
        bn_beta=jnp.zeros((1, dim_out), jnp.float32),
        bn_mean=jnp.zeros((1, dim_out), jnp.float32),
        bn_var=jnp.ones((1, dim_out), jnp.float32),
        attr_protos=jax.random.normal(ks[4], (n_attr, dim_proto), jnp.float32) * 0.1,
        obj_protos=jax.random.normal(ks[5], (n_obj, dim_proto), jnp.float32) * 0.1,
        gcn1_w=jax.random.normal(ks[6], (dim_proto, dim_out), jnp.float32) * 0.1,
        gcn1_b=jax.random.normal(ks[7], (1, dim_out), jnp.float32) * 0.01,
    )
    x = jax.random.normal(ks[8], (N, Cin, H, W), jnp.float32)

    # synthetic dataset: n_comp unique (attr, obj) pairs + pair2idx
    pairs = [(i % n_attr, (i * 3) % n_obj) for i in range(n_comp)]
    pair2idx = {p: i for i, p in enumerate(pairs)}

    # edge_index: each composition node i connects (undirected) to its attr/obj nodes
    src, dst = [], []
    for i, (a, o) in enumerate(pairs):
        an = n_comp + a
        on = n_comp + n_attr + o
        for s, d in [(i, an), (an, i), (i, on), (on, i)]:
            src.append(s)
            dst.append(d)
    edge_index = jnp.array([src, dst], dtype=jnp.int32)
    a_hat = gcn_norm_adj(edge_index, V)

    # -------- one-time, input-independent precompute (hoisted out of forward)
    emb_t = precompute_comp_embeddings(params, a_hat, n_comp)   # (dim_out, P_pad) bf16
    w_fused, vecs = precompute_fused_constants(params)          # (Cin, dim_out) bf16, (3, dim_out)
    emb_t = jax.block_until_ready(emb_t)

    # -------- per-inference path: one fused Pallas call
    fwd = jax.jit(lambda xx: graph_model_forward(xx, w_fused, vecs, emb_t, n_comp))
    logits = fwd(x)
    jax.block_until_ready(logits)
    assert logits.shape == (N, n_comp)
    assert bool(jnp.all(jnp.isfinite(logits)))

    # eval mode: no attr/obj/pair truth -> loss stays 0.0
    loss = 0.0
    preds = {pair: logits[:, pair2idx[pair]] for pair in pairs}
    assert len(preds) == n_comp and all(v.shape == (N,) for v in preds.values())

    print("KERNEL_OK")
</pallas_src>

<mosaic_0001>
module attributes {stable_mosaic.version = 11 : i64} {
  func.func @gcn_comp_norm_kernel(%arg0: i32, %arg1: memref<10x21xf32, #tpu.memory_space<vmem>>, %arg2: memref<21x16xf32, #tpu.memory_space<vmem>>, %arg3: memref<16x32xf32, #tpu.memory_space<vmem>>, %arg4: memref<1x32xf32, #tpu.memory_space<vmem>>, %arg5: memref<10x32xf32, #tpu.memory_space<vmem>>) attributes {dimension_semantics = [#tpu.dimension_semantics<arbitrary>], iteration_bounds = array<i64: 1>, scalar_prefetch = 0 : i64, scratch_operands = 0 : i64, tpu.core_type = #tpu.core_type<tc>, window_params = [{pipeline_mode = #tpu.pipeline_mode<synchronous>, transform_indices = @transform_0, window_bounds = array<i64: 10, 21>}, {pipeline_mode = #tpu.pipeline_mode<synchronous>, transform_indices = @transform_1, window_bounds = array<i64: 21, 16>}, {pipeline_mode = #tpu.pipeline_mode<synchronous>, transform_indices = @transform_2, window_bounds = array<i64: 16, 32>}, {pipeline_mode = #tpu.pipeline_mode<synchronous>, transform_indices = @transform_3, window_bounds = array<i64: 1, 32>}, {pipeline_mode = #tpu.pipeline_mode<synchronous>, transform_indices = @transform_4, window_bounds = array<i64: 10, 32>}]} {
    %c0 = arith.constant 0 : index
    %c0_0 = arith.constant 0 : index
    %0 = vector.load %arg2[%c0, %c0_0] : memref<21x16xf32, #tpu.memory_space<vmem>>, vector<21x16xf32>
    %c0_1 = arith.constant 0 : index
    %c0_2 = arith.constant 0 : index
    %1 = vector.load %arg3[%c0_1, %c0_2] : memref<16x32xf32, #tpu.memory_space<vmem>>, vector<16x32xf32>
    %cst = arith.constant dense<0.000000e+00> : vector<21x32xf32>
    %2 = tpu.matmul %0, %1, %cst {dimension_numbers = #tpu.dot_dimension_numbers<[1], [0], [0], [1], [0, 0, 1, 1], [], []>} : vector<21x16xf32>, vector<16x32xf32>, vector<21x32xf32> -> vector<21x32xf32>
    %c0_3 = arith.constant 0 : index
    %c0_4 = arith.constant 0 : index
    %3 = vector.load %arg1[%c0_3, %c0_4] : memref<10x21xf32, #tpu.memory_space<vmem>>, vector<10x21xf32>
    %cst_5 = arith.constant dense<0.000000e+00> : vector<10x32xf32>
    %4 = tpu.matmul %3, %2, %cst_5 {dimension_numbers = #tpu.dot_dimension_numbers<[1], [0], [0], [1], [0, 0, 1, 1], [], []>} : vector<10x21xf32>, vector<21x32xf32>, vector<10x32xf32> -> vector<10x32xf32>
    %c0_6 = arith.constant 0 : index
    %c0_7 = arith.constant 0 : index
    %5 = vector.load %arg4[%c0_6, %c0_7] : memref<1x32xf32, #tpu.memory_space<vmem>>, vector<1x32xf32>
    %6 = vector.broadcast %5 : vector<1x32xf32> to vector<10x32xf32>
    %7 = arith.addf %4, %6 : vector<10x32xf32>
    %8 = arith.mulf %7, %7 : vector<10x32xf32>
    %cst_8 = arith.constant dense<0.000000e+00> : vector<10xf32>
    %9 = vector.multi_reduction <add>, %8, %cst_8 [1] : vector<10x32xf32> to vector<10xf32>
    %10 = vector.shape_cast %9 : vector<10xf32> to vector<10x1xf32>
    %cst_9 = arith.constant 9.99999996E-13 : f32
    %11 = vector.broadcast %cst_9 : f32 to vector<10x1xf32>
    %12 = arith.addf %10, %11 : vector<10x1xf32>
    %13 = math.rsqrt %12 : vector<10x1xf32>
    %14 = vector.broadcast %13 : vector<10x1xf32> to vector<10x32xf32>
    %15 = arith.mulf %7, %14 : vector<10x32xf32>
    %c0_10 = arith.constant 0 : index
    %c0_11 = arith.constant 0 : index
    %16 = vector.load %arg5[%c0_10, %c0_11] : memref<10x32xf32, #tpu.memory_space<vmem>>, vector<10x32xf32>
    tpu.vector_store %arg5[%c0_10, %c0_11], %15 {strides = array<i32>} : memref<10x32xf32, #tpu.memory_space<vmem>>, vector<10x32xf32>,
    return
  }
  func.func @transform_0(%arg0: i32) -> (i32, i32) {
    %c0_i32 = arith.constant 0 : i32
    %c0_i32_0 = arith.constant 0 : i32
    %c0_i32_1 = arith.constant 0 : i32
    return %c0_i32, %c0_i32_0 : i32, i32
  }
  func.func @transform_1(%arg0: i32) -> (i32, i32) {
    %c0_i32 = arith.constant 0 : i32
    %c0_i32_0 = arith.constant 0 : i32
    %c0_i32_1 = arith.constant 0 : i32
    return %c0_i32, %c0_i32_0 : i32, i32
  }
  func.func @transform_2(%arg0: i32) -> (i32, i32) {
    %c0_i32 = arith.constant 0 : i32
    %c0_i32_0 = arith.constant 0 : i32
    %c0_i32_1 = arith.constant 0 : i32
    return %c0_i32, %c0_i32_0 : i32, i32
  }
  func.func @transform_3(%arg0: i32) -> (i32, i32) {
    %c0_i32 = arith.constant 0 : i32
    %c0_i32_0 = arith.constant 0 : i32
    %c0_i32_1 = arith.constant 0 : i32
    return %c0_i32, %c0_i32_0 : i32, i32
  }
  func.func @transform_4(%arg0: i32) -> (i32, i32) {
    %c0_i32 = arith.constant 0 : i32
    %c0_i32_0 = arith.constant 0 : i32
    %c0_i32_1 = arith.constant 0 : i32
    return %c0_i32, %c0_i32_0 : i32, i32
  }
}

</mosaic_0001>

<llo_original>
// kernel: tpu_custom_call.1
$region0: #{tpu_custom_call.1}
  #allocation0 [shape = 'u32[]', space=smem, size = 0x4, offset = 0x4, fixed_abs, tag = 'smem constant byte address 0x4 - core index']
  #allocation1 [shape = 'u32[72,128]{1,0:T(1,128)}', space=vmem, size = 0x9000, scoped, tag = 'internal scratch']
  %s0 = inlined_call_operand.vmem [shape: f32[10,21], index: 0, kind: input, shape index: {}]
  %s1 = inlined_call_operand.vmem [shape: f32[21,16], index: 1, kind: input, shape index: {}]
  %s2 = inlined_call_operand.vmem [shape: f32[16,32], index: 2, kind: input, shape index: {}]
  %s3 = inlined_call_operand.vmem [shape: f32[1,32], index: 3, kind: input, shape index: {}]
  %s4 = inlined_call_operand.hbm [shape: f32[10,32], index: 4, kind: output, shape index: {}]
  %s5 = sld [smem:[#allocation0]]
  $region26: #{tpu_custom_call.1} parent=0
    _
  %s7 = ssub.s32 1, %s5
  %s8 = scalar_select 0, %s7, %s5
  $region1: #{tpu_custom_call.1} parent=0
    #allocation2 [shape = 'u8[8192]{0}', space=vmem, size = 0x2000, scoped, tag = 'output window, operand 0, single buffered']
    #allocation3 [shape = 's32[1]{0}', space=sflag, size = 0x4, scoped, tag = 'scoped memory for tpu_custom_call.1']
    %9 = vsyncpa [#allocation3], 0
    // Predicated region
    $region2: #{tpu_custom_call.1} parent=1 // pred_check
      _
    $region3: #{tpu_custom_call.1} parent=1 // pred_check_branch
      %11 = sbr.rel (0) target = $region5
    $region4: #{tpu_custom_call.1} parent=1 // pred_region
      _
    $region5: #{tpu_custom_call.1} parent=1 // pred_fallthru
      _
    // Predicated region
    $region6: #{tpu_custom_call.1} parent=1 // pred_check
      _
    $region7: #{tpu_custom_call.1} parent=1 // pred_check_branch
      %13 = sbr.rel (0) target = $region9
    $region8: #{tpu_custom_call.1} parent=1 // pred_region
      _
    $region9: #{tpu_custom_call.1} parent=1 // pred_fallthru
      _
    // Predicated region
    $region10: #{tpu_custom_call.1} parent=1 // pred_check
      _
    $region11: #{tpu_custom_call.1} parent=1 // pred_check_branch
      %15 = sbr.rel (0) target = $region13
    $region12: #{tpu_custom_call.1} parent=1 // pred_region
      _
    $region13: #{tpu_custom_call.1} parent=1 // pred_fallthru
      _
    // Predicated region
    $region14: #{tpu_custom_call.1} parent=1 // pred_check
      _
    $region15: #{tpu_custom_call.1} parent=1 // pred_check_branch
      %17 = sbr.rel (0) target = $region17
    $region16: #{tpu_custom_call.1} parent=1 // pred_region
      _
    $region17: #{tpu_custom_call.1} parent=1 // pred_fallthru
      _
    %v18 = vld [vmem:[%s1] sm:$0xff]
    %v19 = vld [vmem:[%s1 + $0x8] sm:$0xff]
    %v20 = vld [vmem:[%s1 + $0x10] sm:$0x1f]
    %v21 = vld [vmem:[%s2] sm:$0xff]
    %v22 = vld [vmem:[%s2 + $0x8] sm:$0xff]
    %vm23 = vcmask 130048
    %v25 = vsel %vm23, %v18, 0
    %v28 = vsel %vm23, %v19, 0
    %v31 = vsel %vm23, %v20, 0
    %33 = vmatpush.msra.mxu0 0.0
    %34 = vmatpush.msra.mxu0 0.0
    %35 = vmatpush.msra.mxu0 0.0
    %36 = vmatpush.msra.mxu0 0.0
    %37 = vmatpush.msra.mxu0 0.0
    %38 = vmatpush.msra.mxu0 0.0
    %39 = vmatpush.msra.mxu0 0.0
    %40 = vmatpush.msra.mxu0 0.0
    %41 = vmatpush.msra.mxu0 0.0
    %42 = vmatpush.msra.mxu0 0.0
    %43 = vmatpush.msra.mxu0 0.0
    %44 = vmatpush.msra.mxu0 0.0
    %45 = vmatpush.msra.mxu0 0.0
    %46 = vmatpush.msra.mxu0 0.0
    %47 = vmatpush.msra.mxu0 %v22
    %48 = vmatpush.msra.mxu0 %v21
    %49 = vmatmul.f32.gmra.mxu0 %v25
    %v50 = vpop.f32.mrf.mxu0
    %v51 = vadd.f32 0.0, %v50
    %52 = vmatmul.f32.gmra.mxu0 %v28
    %v53 = vpop.f32.mrf.mxu0
    %v54 = vadd.f32 0.0, %v53
    %55 = vmatmul.f32.gmra.mxu0 %v31
    %v56 = vpop.f32.mrf.mxu0
    %v57 = vadd.f32 0.0, %v56
    %58 = vdwg.mxu0
    %v59 = vld [vmem:[%s0] sm:$0xff]
    %v60 = vld [vmem:[%s0 + $0x8] sm:$0x3]
    %v61 = vld [vmem:[%s3] sm:$0x1]
    %v63 = vperm.slane %v61, 0
    %vm65 = vcmask 171008
    %v67 = vsel %vm65, %v59, 0
    %v70 = vsel %vm65, %v60, 0
    %vm72 = vcmask 1044480
    %v74 = vsel %vm72, %v57, 0
    %76 = vmatpush.msra.mxu0 0.0
    %77 = vmatpush.msra.mxu0 0.0
    %78 = vmatpush.msra.mxu0 0.0
    %79 = vmatpush.msra.mxu0 0.0
    %80 = vmatpush.msra.mxu0 0.0
    %81 = vmatpush.msra.mxu0 0.0
    %82 = vmatpush.msra.mxu0 0.0
    %83 = vmatpush.msra.mxu0 0.0
    %84 = vmatpush.msra.mxu0 0.0
    %85 = vmatpush.msra.mxu0 0.0
    %86 = vmatpush.msra.mxu0 0.0
    %87 = vmatpush.msra.mxu0 0.0
    %88 = vmatpush.msra.mxu0 0.0
    %89 = vmatpush.msra.mxu0 %v74
    %90 = vmatpush.msra.mxu0 %v54
    %91 = vmatpush.msra.mxu0 %v51
    %92 = vmatmul.f32.gmra.mxu0 %v67
    %v93 = vpop.f32.mrf.mxu0
    %v94 = vadd.f32 %v63, %v93
    %95 = vmatmul.f32.gmra.mxu0 %v70
    %v96 = vpop.f32.mrf.mxu0
    %v97 = vadd.f32 %v63, %v96
    %98 = vdwg.mxu0
    %v99 = vmul.f32 %v94, %v94
    %v100 = vmul.f32 %v97, %v97
    %vm101 = vcmask 261120
    %v102 = vsel %vm101, %v99, 0.0
    %103 = vadd.xlane.f32.xlu0 %v102
    %v104 = vpop.xlane.xlu0 %103
    %vm105 = vcmask 254976
    %v106 = vsel %vm105, %v100, 0.0
    %107 = vadd.xlane.f32.xlu0 %v106
    %v108 = vpop.xlane.xlu0 %107
    %v109 = vadd.f32 %v104, 1e-12
    %v110 = vadd.f32 %v108, 1e-12
    %v111 = vrsqrt.pop %v109
    %v112 = vmul.f32 %v111, %v109
    %v113 = vmul.f32 %v112, %v111
    %v114 = vmul.f32 0.5, %v113
    %v115 = vsub.f32 1.5, %v114
    %v116 = vmul.f32 %v111, %v115
    %vm117 = vweird.f32 %v109
    %vm118 = vweird.f32 %v111
    %vm119 = vmor %vm117, %vm118
    %v120 = vsel %vm119, %v111, %v116
    %v121 = vrsqrt.pop %v110
    %v122 = vmul.f32 %v121, %v110
    %v123 = vmul.f32 %v122, %v121
    %v124 = vmul.f32 0.5, %v123
    %v125 = vsub.f32 1.5, %v124
    %v126 = vmul.f32 %v121, %v125
    %vm127 = vweird.f32 %v110
    %vm128 = vweird.f32 %v121
    %vm129 = vmor %vm127, %vm128
    %v130 = vsel %vm129, %v121, %v126
    %v131 = vmul.f32 %v94, %v120
    %v132 = vmul.f32 %v97, %v130
    %133 = vst.msk [vmem:[#allocation2] sm:$0xff] %vm101, %v131
    %134 = vst.msk [vmem:[#allocation2 + $0x8] sm:$0x3] %vm105, %v132
    // Predicated region
    $region18: #{tpu_custom_call.1} parent=1 // pred_check
      _
    $region19: #{tpu_custom_call.1} parent=1 // pred_check_branch
      %136 = sbr.rel (0) target = $region21
    $region20: #{tpu_custom_call.1} parent=1 // pred_region
      %138 = vsyncadd [#allocation3], 0
      %s139 = sshll.u32 [#allocation2], 4
      %s140 = int_to_ptr.vmem [resolvable:$true] %s139
      %s141 = sshll.u32 %s4, 4
      %s142 = int_to_ptr.hbm [resolvable:$true] %s141
      %147 = dma.vmem_to_hbm [thread:$0]  %s140, 256, %s142, [#allocation3], 128, 128, 8
    $region21: #{tpu_custom_call.1} parent=1 // pred_fallthru
      _
    // Predicated region
    $region22: #{tpu_custom_call.1} parent=1 // pred_check
      _
    $region23: #{tpu_custom_call.1} parent=1 // pred_check_branch
      %149 = sbr.rel (0) target = $region25
    $region24: #{tpu_custom_call.1} parent=1 // pred_region
      %151 = dma.done [#allocation3], 256
    $region25: #{tpu_custom_call.1} parent=1 // pred_fallthru
      _
    %152 = vsyncpa [#allocation3], 1

</llo_original>
